<compile_context>
chip_gen: v7x
topology: tpu7x:2x2x1
jax: 0.10.0
libtpu: 0.0.40
codegen_flags: <defaults>
</compile_context>

<pallas_src>
import functools

import jax
import jax.numpy as jnp
from jax.experimental import pallas as pl
from jax.experimental.pallas import tpu as pltpu

_LANES = 128
_SUBLANES = 8
_TARGET_STEP_BYTES = 8 * 1024 * 1024   # combined bytes of both input tiles / step


def _cdiv(a, b):
    return -(-a // b)


def _round_up(x, m):
    return _cdiv(x, m) * m


def _num_tensorcores():
    """2 TensorCores per chip on v7x, 1 on v5e/v6e (best-effort detection)."""
    try:
        kind = jax.devices()[0].device_kind.lower()
    except Exception:
        return 1
    return 2 if ("v7" in kind or "7x" in kind) else 1


def _recon_loss_kernel(pred_ref, tgt_ref, out_ref, *,
                       loss_type, tile_rows, rows_slab, inner):
    """Accumulate per-tile loss directly into the (8, 128) output block."""
    p = pl.program_id(0)
    r = pl.program_id(1)
    bi = p * inner + r            # true (unclamped) block index
    row0 = bi * tile_rows         # first global row this step is responsible for

    @pl.when(r == 0)
    def _():
        out_ref[...] = jnp.zeros_like(out_ref)

    diff = pred_ref[...].astype(jnp.float32) - tgt_ref[...].astype(jnp.float32)
    if loss_type == "mse":
        per = diff * diff
    elif loss_type == "l1":
        per = jnp.abs(diff)
    elif loss_type == "huber":
        abs_d = jnp.abs(diff)
        per = jnp.where(abs_d < 1.0, 0.5 * diff * diff, abs_d - 0.5)
    else:
        raise ValueError(f"Unknown loss type: {loss_type}")

    def _accumulate(vals):
        # Fold rows into 8-sublane groups and sum along the group axis: pure
        # vreg-aligned VPU adds, lanes/sublanes preserved (no XLU reduce).
        out_ref[...] += vals.reshape(-1, _SUBLANES, _LANES).sum(axis=0)

    is_full = row0 + tile_rows <= rows_slab

    @pl.when(is_full)
    def _():
        _accumulate(per)

    @pl.when(jnp.logical_not(is_full))
    def _():
        # Ragged / clamped boundary tile: mask rows beyond the valid slab.
        row_ids = jax.lax.broadcasted_iota(jnp.int32, per.shape, 0)
        _accumulate(jnp.where(row0 + row_ids < rows_slab, per, 0.0))


def reconstruction_loss(pred, target, loss_type: str = "mse"):
    """Scalar reconstruction loss between (B, S, D) embeddings."""
    if loss_type not in ("mse", "l1", "huber"):
        raise ValueError(f"Unknown loss type: {loss_type}")
    assert pred.shape == target.shape, "shape mismatch"

    flat_n = 1
    for d in pred.shape:
        flat_n *= int(d)

    sz_p = jnp.dtype(pred.dtype).itemsize
    sz_t = jnp.dtype(target.dtype).itemsize
    # Sublane quantum driven by the NARROWEST dtype (f32 -> 8, bf16 -> 16, i8 -> 32).
    sub_q = max(_SUBLANES, 32 // min(sz_p, sz_t))

    # Minimal lane-dense slab: pad only to the (sub_q * 128) alignment quantum.
    rows_slab = _round_up(_cdiv(flat_n, _LANES), sub_q)
    n_slab = rows_slab * _LANES
    pad_n = n_slab - flat_n

    # Byte-based tile sizing (~8 MiB of input per grid step), ragged tail OK.
    tile_rows = (_TARGET_STEP_BYTES // (_LANES * (sz_p + sz_t))) // sub_q * sub_q
    tile_rows = max(sub_q, tile_rows)
    tile_rows = min(tile_rows, rows_slab)

    total_blocks = _cdiv(rows_slab, tile_rows)
    num_partials = max(1, min(_num_tensorcores(), total_blocks))
    inner = _cdiv(_cdiv(rows_slab, num_partials), tile_rows)
    last_block = total_blocks - 1

    if num_partials == 1:
        def in_map(p, r):
            return (r, 0)
    else:
        # Clamp so every DMA starts in-bounds; duplicated blocks are fully
        # masked in-kernel (their rows all have row0 >= rows_slab).
        def in_map(p, r):
            return (jnp.minimum(p * inner + r, last_block), 0)

    def _as_slab(x):
        flat = x.reshape(-1)
        if pad_n:
            flat = jnp.pad(flat, (0, pad_n))          # tiny (< sub_q*128 elems)
        return flat.reshape(rows_slab, _LANES)

    pred2d = _as_slab(pred)
    tgt2d = _as_slab(target)

    kernel = functools.partial(_recon_loss_kernel, loss_type=loss_type,
                               tile_rows=tile_rows, rows_slab=rows_slab,
                               inner=inner)

    out_bytes = num_partials * _SUBLANES * _LANES * 4
    cost = pl.CostEstimate(flops=4 * n_slab, transcendentals=0,
                           bytes_accessed=n_slab * (sz_p + sz_t) + out_bytes)

    partials = pl.pallas_call(
        kernel,
        out_shape=jax.ShapeDtypeStruct((num_partials * _SUBLANES, _LANES),
                                       jnp.float32),
        grid_spec=pltpu.PrefetchScalarGridSpec(
            num_scalar_prefetch=0,
            grid=(num_partials, inner),
            in_specs=[
                pl.BlockSpec((tile_rows, _LANES), in_map),
                pl.BlockSpec((tile_rows, _LANES), in_map),
            ],
            out_specs=pl.BlockSpec((_SUBLANES, _LANES), lambda p, r: (p, 0)),
        ),
        compiler_params=pltpu.CompilerParams(
            dimension_semantics=("parallel", "arbitrary"),
            vmem_limit_bytes=40 * 1024 * 1024,     # safe on v5e/v6e/v7x (64 MiB)
            allow_input_fusion=[True, True],       # let any tiny pad fuse in
        ),
        cost_estimate=cost,
    )(pred2d, tgt2d)

    # Tiny final reduction (num_partials * 1024 f32) + mean in plain JAX.
    return jnp.sum(partials) / jnp.float32(flat_n)


def _reference(pred, target, loss_type):
    diff = pred.astype(jnp.float32) - target.astype(jnp.float32)
    if loss_type == "mse":
        per = diff * diff
    elif loss_type == "l1":
        per = jnp.abs(diff)
    else:  # huber, delta=1.0
        ad = jnp.abs(diff)
        per = jnp.where(ad < 1.0, 0.5 * diff * diff, ad - 0.5)
    return jnp.mean(per)


if __name__ == "__main__":
    key = jax.random.PRNGKey(0)
    k1, k2 = jax.random.split(key)
    B, S, D = 2, 8, 32  # (batch, seq_len, audio_dim)
    pred = jax.random.normal(k1, (B, S, D), dtype=jnp.float32)
    target = jax.random.normal(k2, (B, S, D), dtype=jnp.float32)

    ok = True
    for lt in ("mse", "l1", "huber"):
        got = jax.block_until_ready(reconstruction_loss(pred, target, lt))
        want = _reference(pred, target, lt)
        if not jnp.allclose(got, want, rtol=1e-5, atol=1e-5):
            ok = False
            print(f"MISMATCH loss_type={lt}: got={got}, want={want}")

    if ok:
        print("KERNEL_OK")
</pallas_src>

<mosaic_0001>
module attributes {stable_mosaic.version = 11 : i64} {
  func.func @_recon_loss_kernel(%arg0: i32, %arg1: i32, %arg2: memref<8x128xf32, #tpu.memory_space<vmem>>, %arg3: memref<8x128xf32, #tpu.memory_space<vmem>>, %arg4: memref<8x128xf32, #tpu.memory_space<vmem>>) attributes {dimension_semantics = [#tpu.dimension_semantics<parallel>, #tpu.dimension_semantics<arbitrary>], iteration_bounds = array<i64: 1, 1>, scalar_prefetch = 0 : i64, scratch_operands = 0 : i64, tpu.core_type = #tpu.core_type<tc>, window_params = [{transform_indices = @transform_0, window_bounds = array<i64: 8, 128>}, {transform_indices = @transform_1, window_bounds = array<i64: 8, 128>}, {transform_indices = @transform_2, window_bounds = array<i64: 8, 128>}]} {
    %c1_i32 = arith.constant 1 : i32
    %0 = arith.muli %arg0, %c1_i32 : i32
    %1 = arith.addi %0, %arg1 : i32
    %c8_i32 = arith.constant 8 : i32
    %2 = arith.muli %1, %c8_i32 : i32
    %c0_i32 = arith.constant 0 : i32
    %3 = arith.cmpi eq, %arg1, %c0_i32 : i32
    %4 = arith.extui %3 : i1 to i32
    %c0_i32_0 = arith.constant 0 : i32
    %5 = arith.cmpi ne, %4, %c0_i32_0 : i32
    scf.if %5 {
      %cst = arith.constant 0.000000e+00 : f32
      %17 = vector.broadcast %cst : f32 to vector<8x128xf32>
      %c0_8 = arith.constant 0 : index
      %c0_9 = arith.constant 0 : index
      %18 = vector.load %arg4[%c0_8, %c0_9] : memref<8x128xf32, #tpu.memory_space<vmem>>, vector<8x128xf32>
      tpu.vector_store %arg4[%c0_8, %c0_9], %17 {strides = array<i32>} : memref<8x128xf32, #tpu.memory_space<vmem>>, vector<8x128xf32>,
    } else {
    }
    %c0 = arith.constant 0 : index
    %c0_1 = arith.constant 0 : index
    %6 = vector.load %arg2[%c0, %c0_1] : memref<8x128xf32, #tpu.memory_space<vmem>>, vector<8x128xf32>
    %c0_2 = arith.constant 0 : index
    %c0_3 = arith.constant 0 : index
    %7 = vector.load %arg3[%c0_2, %c0_3] : memref<8x128xf32, #tpu.memory_space<vmem>>, vector<8x128xf32>
    %8 = arith.subf %6, %7 : vector<8x128xf32>
    %9 = arith.mulf %8, %8 : vector<8x128xf32>
    %c8_i32_4 = arith.constant 8 : i32
    %10 = arith.addi %2, %c8_i32_4 : i32
    %c8_i32_5 = arith.constant 8 : i32
    %11 = arith.cmpi sle, %10, %c8_i32_5 : i32
    %12 = arith.extui %11 : i1 to i32
    %c0_i32_6 = arith.constant 0 : i32
    %13 = arith.cmpi ne, %12, %c0_i32_6 : i32
    scf.if %13 {
      %c0_8 = arith.constant 0 : index
      %c0_9 = arith.constant 0 : index
      %17 = vector.load %arg4[%c0_8, %c0_9] : memref<8x128xf32, #tpu.memory_space<vmem>>, vector<8x128xf32>
      %18 = vector.shape_cast %9 : vector<8x128xf32> to vector<1x8x128xf32>
      %cst = arith.constant dense<0.000000e+00> : vector<8x128xf32>
      %19 = vector.multi_reduction <add>, %18, %cst [0] : vector<1x8x128xf32> to vector<8x128xf32>
      %20 = arith.addf %17, %19 : vector<8x128xf32>
      %c0_10 = arith.constant 0 : index
      %c0_11 = arith.constant 0 : index
      %21 = vector.load %arg4[%c0_10, %c0_11] : memref<8x128xf32, #tpu.memory_space<vmem>>, vector<8x128xf32>
      tpu.vector_store %arg4[%c0_10, %c0_11], %20 {strides = array<i32>} : memref<8x128xf32, #tpu.memory_space<vmem>>, vector<8x128xf32>,
    } else {
    }
    %true = arith.constant true
    %14 = arith.xori %11, %true : i1
    %15 = arith.extui %14 : i1 to i32
    %c0_i32_7 = arith.constant 0 : i32
    %16 = arith.cmpi ne, %15, %c0_i32_7 : i32
    scf.if %16 {
      %17 = tpu.iota {dimensions = array<i32: 0>} : vector<8x128xi32>
      %18 = vector.broadcast %2 : i32 to vector<8x128xi32>
      %19 = arith.addi %18, %17 : vector<8x128xi32>
      %c8_i32_8 = arith.constant 8 : i32
      %20 = vector.broadcast %c8_i32_8 : i32 to vector<8x128xi32>
      %21 = arith.cmpi slt, %19, %20 : vector<8x128xi32>
      %cst = arith.constant 0.000000e+00 : f32
      %22 = vector.broadcast %cst : f32 to vector<8x128xf32>
      %23 = arith.select %21, %9, %22 : vector<8x128xi1>, vector<8x128xf32>
      %c0_9 = arith.constant 0 : index
      %c0_10 = arith.constant 0 : index
      %24 = vector.load %arg4[%c0_9, %c0_10] : memref<8x128xf32, #tpu.memory_space<vmem>>, vector<8x128xf32>
      %25 = vector.shape_cast %23 : vector<8x128xf32> to vector<1x8x128xf32>
      %cst_11 = arith.constant dense<0.000000e+00> : vector<8x128xf32>
      %26 = vector.multi_reduction <add>, %25, %cst_11 [0] : vector<1x8x128xf32> to vector<8x128xf32>
      %27 = arith.addf %24, %26 : vector<8x128xf32>
      %c0_12 = arith.constant 0 : index
      %c0_13 = arith.constant 0 : index
      %28 = vector.load %arg4[%c0_12, %c0_13] : memref<8x128xf32, #tpu.memory_space<vmem>>, vector<8x128xf32>
      tpu.vector_store %arg4[%c0_12, %c0_13], %27 {strides = array<i32>} : memref<8x128xf32, #tpu.memory_space<vmem>>, vector<8x128xf32>,
    } else {
    }
    return
  }
  func.func @transform_0(%arg0: i32, %arg1: i32) -> (i32, i32) {
    %c0_i32 = arith.constant 0 : i32
    %c0_i32_0 = arith.constant 0 : i32
    return %arg1, %c0_i32 : i32, i32
  }
  func.func @transform_1(%arg0: i32, %arg1: i32) -> (i32, i32) {
    %c0_i32 = arith.constant 0 : i32
    %c0_i32_0 = arith.constant 0 : i32
    return %arg1, %c0_i32 : i32, i32
  }
  func.func @transform_2(%arg0: i32, %arg1: i32) -> (i32, i32) {
    %c0_i32 = arith.constant 0 : i32
    %c0_i32_0 = arith.constant 0 : i32
    return %arg0, %c0_i32 : i32, i32
  }
}

</mosaic_0001>

<llo_original>
// kernel: tpu_custom_call.1
$region0: #{tpu_custom_call.1}
  #allocation0 [shape = 'u32[]', space=smem, size = 0x4, offset = 0x4, fixed_abs, tag = 'smem constant byte address 0x4 - core index']
  #allocation1 [shape = 'u32[144,128]{1,0:T(1,128)}', space=vmem, size = 0x12000, scoped, tag = 'internal scratch']
  %s0 = inlined_call_operand.hbm [shape: f32[8,128], index: 0, kind: input, shape index: {}]
  %s1 = inlined_call_operand.hbm [shape: f32[8,128], index: 1, kind: input, shape index: {}]
  %s2 = inlined_call_operand.hbm [shape: f32[8,128], index: 2, kind: output, shape index: {}]
  %s3 = sld [smem:[#allocation0]]
  $region38: #{tpu_custom_call.1} parent=0
    _
  %s5 = ssub.s32 1, %s3
  %s6 = scalar_select 0, %s5, %s3
  $region1: #{tpu_custom_call.1} parent=0
    #allocation2 [shape = 'u8[4096]{0}', space=vmem, size = 0x1000, scoped, tag = 'input window, operand 0, single buffered']
    #allocation3 [shape = 's32[1]{0}', space=sflag, size = 0x4, scoped, tag = 'scoped memory for tpu_custom_call.1']
    #allocation4 [shape = 's32[1]{0}', space=sflag, size = 0x4, scoped, tag = 'scoped memory for tpu_custom_call.1']
    #allocation5 [shape = 'u8[4096]{0}', space=vmem, size = 0x1000, scoped, tag = 'input window, operand 1, single buffered']
    #allocation6 [shape = 's32[1]{0}', space=sflag, size = 0x4, scoped, tag = 'scoped memory for tpu_custom_call.1']
    #allocation7 [shape = 'u8[4096]{0}', space=vmem, size = 0x1000, scoped, tag = 'output window, operand 0, single buffered']
    %7 = vsyncpa [#allocation3], 0
    %8 = vsyncpa [#allocation6], 0
    %9 = vsyncpa [#allocation4], 0
    // Predicated region
    $region2: #{tpu_custom_call.1} parent=1 // pred_check
      _
    $region3: #{tpu_custom_call.1} parent=1 // pred_check_branch
      %11 = sbr.rel (0) target = $region5
    $region4: #{tpu_custom_call.1} parent=1 // pred_region
      %s13 = ssub.s32 128, 128
      %14 = vsyncadd [#allocation3], %s13
      %s16 = sshll.u32 [#allocation2], 4
      %s17 = int_to_ptr.vmem [resolvable:$true] %s16
      %19 = dma.hbm_to_vmem [thread:$0]  %s0, 128, %s17, [#allocation3]
    $region5: #{tpu_custom_call.1} parent=1 // pred_fallthru
      _
    // Predicated region
    $region6: #{tpu_custom_call.1} parent=1 // pred_check
      _
    $region7: #{tpu_custom_call.1} parent=1 // pred_check_branch
      %21 = sbr.rel (0) target = $region9
    $region8: #{tpu_custom_call.1} parent=1 // pred_region
      %s23 = ssub.s32 128, 128
      %24 = vsyncadd [#allocation6], %s23
      %s26 = sshll.u32 [#allocation5], 4
      %s27 = int_to_ptr.vmem [resolvable:$true] %s26
      %29 = dma.hbm_to_vmem [thread:$0]  %s1, 128, %s27, [#allocation6]
    $region9: #{tpu_custom_call.1} parent=1 // pred_fallthru
      _
    // Predicated region
    $region10: #{tpu_custom_call.1} parent=1 // pred_check
      _
    $region11: #{tpu_custom_call.1} parent=1 // pred_check_branch
      %31 = sbr.rel (0) target = $region13
    $region12: #{tpu_custom_call.1} parent=1 // pred_region
      %32 = dma.done [#allocation3], 128
    $region13: #{tpu_custom_call.1} parent=1 // pred_fallthru
      _
    // Predicated region
    $region14: #{tpu_custom_call.1} parent=1 // pred_check
      _
    $region15: #{tpu_custom_call.1} parent=1 // pred_check_branch
      %34 = sbr.rel (0) target = $region17
    $region16: #{tpu_custom_call.1} parent=1 // pred_region
      %35 = dma.done [#allocation6], 128
    $region17: #{tpu_custom_call.1} parent=1 // pred_fallthru
      _
    %s36 = sadd.s32 0, 0
    %s37 = smul.u32 %s36, 8
    %p38 = scmp.eq.s32.totalorder 0, 0
    // Predicated region
    $region18: #{tpu_custom_call.1} parent=1 // pred_check
      %p39 = pneg %p38
    $region19: #{tpu_custom_call.1} parent=1 // pred_check_branch
      %41 = sbr.rel (%p39) target = $region21
    $region20: #{tpu_custom_call.1} parent=1 // pred_region
      %42 = vst [vmem:[#allocation7] sm:$0xff] 0.0
    $region21: #{tpu_custom_call.1} parent=1 // pred_fallthru
      _
    %v43 = vld [vmem:[#allocation2] sm:$0xff]
    %v44 = vld [vmem:[#allocation5] sm:$0xff]
    %v45 = vsub.f32 %v43, %v44
    %v46 = vmul.f32 %v45, %v45
    %s47 = sadd.s32 %s37, 8
    %p48 = scmp.le.s32.totalorder %s47, 8
    // Predicated region
    $region22: #{tpu_custom_call.1} parent=1 // pred_check
      %p49 = pneg %p48
    $region23: #{tpu_custom_call.1} parent=1 // pred_check_branch
      %51 = sbr.rel (%p49) target = $region25
    $region24: #{tpu_custom_call.1} parent=1 // pred_region
      %v52 = vld [vmem:[#allocation7] sm:$0xff]
      %v53 = vadd.f32 %v46, 0.0
      %v54 = vadd.f32 %v52, %v53
      %55 = vst [vmem:[#allocation7] sm:$0xff] %v54
    $region25: #{tpu_custom_call.1} parent=1 // pred_fallthru
      _
    %p56 = scmp.gt.s32.totalorder %s47, 8
    // Predicated region
    $region26: #{tpu_custom_call.1} parent=1 // pred_check
      %p57 = pneg %p56
    $region27: #{tpu_custom_call.1} parent=1 // pred_check_branch
      %59 = sbr.rel (%p57) target = $region29
    $region28: #{tpu_custom_call.1} parent=1 // pred_region
      %v60 = vlaneseq
      %v61 = vshrl.u32 %v60, 7
      %v62 = vstv %s37
      %v63 = vadd.s32 %v62, %v61
      %vm64 = vcmp.lt.s32.totalorder %v63, 8
      %v65 = vsel %vm64, %v46, 0.0
      %v66 = vld [vmem:[#allocation7] sm:$0xff]
      %v67 = vadd.f32 %v65, 0.0
      %v68 = vadd.f32 %v66, %v67
      %69 = vst [vmem:[#allocation7] sm:$0xff] %v68
    $region29: #{tpu_custom_call.1} parent=1 // pred_fallthru
      _
    // Predicated region
    $region30: #{tpu_custom_call.1} parent=1 // pred_check
      _
    $region31: #{tpu_custom_call.1} parent=1 // pred_check_branch
      %71 = sbr.rel (0) target = $region33
    $region32: #{tpu_custom_call.1} parent=1 // pred_region
      %s73 = ssub.s32 128, 128
      %74 = vsyncadd [#allocation4], %s73
      %s76 = sshll.u32 [#allocation7], 4
      %s77 = int_to_ptr.vmem [resolvable:$true] %s76
      %79 = dma.vmem_to_hbm [thread:$0]  %s77, 128, %s2, [#allocation4]
    $region33: #{tpu_custom_call.1} parent=1 // pred_fallthru
      _
    // Predicated region
    $region34: #{tpu_custom_call.1} parent=1 // pred_check
      _
    $region35: #{tpu_custom_call.1} parent=1 // pred_check_branch
      %81 = sbr.rel (0) target = $region37
    $region36: #{tpu_custom_call.1} parent=1 // pred_region
      %82 = dma.done [#allocation4], 128
    $region37: #{tpu_custom_call.1} parent=1 // pred_fallthru
      _
    %83 = vsyncpa [#allocation3], 1
    %84 = vsyncpa [#allocation6], 1
    %85 = vsyncpa [#allocation4], 1

</llo_original>
